<compile_context>
chip_gen: v6e
topology: v6e:2x2x1
jax: 0.10.0
libtpu: 0.0.40
codegen_flags: <defaults>
</compile_context>

<pallas_src>
import math
from functools import partial

import jax
import jax.numpy as jnp
from jax import lax
from jax.experimental import pallas as pl
from jax.experimental.pallas import tpu as pltpu

_VMEM = pl.BlockSpec(memory_space=pltpu.MemorySpace.VMEM)
_LANE = 128  # gate blocks are padded to this lane width so slices are vreg-aligned


def _round_up(x, m):
    return ((x + m - 1) // m) * m


# ---------------------------------------------------------------------------
# Fused kernel: all GRU layers + h2o linear + argmax, single invocation (no grid).
# ---------------------------------------------------------------------------

def make_decoder_kernel(num_layers, hidden_size, gate_width):
    H, Hg = hidden_size, gate_width

    def kernel(*refs):
        # refs = (x, state, [W, bias] * L, w_h2o, b_h2o, scores_out, idx_out)
        x_ref, state_ref = refs[0], refs[1]
        layer_refs = refs[2:2 + 2 * num_layers]
        w_o_ref = refs[2 + 2 * num_layers]
        b_o_ref = refs[3 + 2 * num_layers]
        scores_ref = refs[4 + 2 * num_layers]
        idx_ref = refs[5 + 2 * num_layers]

        x = x_ref[...]                                        # [B, in_dim] f32
        for layer in range(num_layers):                       # unrolled in Python
            w_ref, b_ref = layer_refs[2 * layer], layer_refs[2 * layer + 1]
            h = state_ref[layer]                              # [B, H] f32

            # One fused MXU push per layer: [x | h] @ block-diagonal weight.
            # Gate blocks (each Hg lanes wide, first H lanes valid):
            #   [0:Hg)    -> x@W_ir + h@W_hr  (+ b_ir + b_hr)
            #   [Hg:2Hg)  -> x@W_iz + h@W_hz  (+ b_iz + b_hz)
            #   [2Hg:3Hg) -> x@W_in           (+ b_in)
            #   [3Hg:4Hg) ->          h@W_hn  (+ b_hn)
            xh = jnp.concatenate([x, h], axis=1)              # [B, in_dim+H]
            g = jnp.dot(xh.astype(jnp.bfloat16), w_ref[...],
                        preferred_element_type=jnp.float32) + b_ref[...]

            # All slice starts are multiples of 128 -> no XLU rotate; gate math in f32.
            r = jax.nn.sigmoid(g[:, 0:H])
            z = jax.nn.sigmoid(g[:, Hg:Hg + H])
            n = jnp.tanh(g[:, 2 * Hg:2 * Hg + H] + r * g[:, 3 * Hg:3 * Hg + H])
            x = (1.0 - z) * n + z * h                         # new hidden, feeds next layer

        # h2o head (vocab unpadded; tiny output -> masked store is negligible).
        scores = jnp.dot(x.astype(jnp.bfloat16), w_o_ref[...],
                         preferred_element_type=jnp.float32) + b_o_ref[...]
        scores_ref[...] = scores.astype(scores_ref.dtype)

        # Fused argmax (index of the first maximal value, like torch / jnp.argmax).
        vocab = scores.shape[1]
        max_val = jnp.max(scores, axis=1, keepdims=True)                  # [B, 1]
        lane_id = lax.broadcasted_iota(jnp.int32, scores.shape, 1)
        cand = jnp.where(scores == max_val,
                         lane_id.astype(jnp.float32), float(vocab))
        idx_ref[...] = jnp.min(cand, axis=1, keepdims=True).astype(jnp.int32)

    return kernel


# ---------------------------------------------------------------------------
# Wrapper (single jitted executable, single pallas_call, no post-kernel math)
# ---------------------------------------------------------------------------

@jax.jit
def decoder_forward(params, inp, state):
    """Equivalent of Decoder.forward in eval mode.

    inp:   [1, B, input_size]   (seq_len must be 1)
    state: [num_layers, B, hidden_size]
    returns (idx [B] int32, scores [B, vocab] float32)
    """
    if inp.shape[0] != 1:
        raise RuntimeError("Bad dimensions of tensor: seq_len must be 1")
    x = inp[0]                                    # [B, input_size]
    B = x.shape[0]
    num_layers, _, H = state.shape
    w_o, b_o = params["w_h2o_t"], params["b_h2o"]
    V = w_o.shape[1]
    Hg = params["gru"][0][0].shape[1] // 4        # static (from array shape)

    flat_weights = []
    for layer_params in params["gru"]:
        flat_weights.extend(layer_params)         # (W, bias) per layer

    inputs = (x, state, *flat_weights, w_o, b_o)

    flops = sum(2 * B * w.shape[0] * w.shape[1] for w, _ in params["gru"])
    flops += 2 * B * H * V
    bytes_accessed = sum(int(a.size) * a.dtype.itemsize for a in inputs)
    bytes_accessed += B * V * 4 + B * 4

    scores, idx2d = pl.pallas_call(
        make_decoder_kernel(num_layers, H, Hg),
        out_shape=(jax.ShapeDtypeStruct((B, V), jnp.float32),
                   jax.ShapeDtypeStruct((B, 1), jnp.int32)),
        in_specs=[_VMEM] * len(inputs),
        out_specs=(_VMEM, _VMEM),
        cost_estimate=pl.CostEstimate(
            flops=flops,
            transcendentals=num_layers * 3 * B * H,
            bytes_accessed=bytes_accessed),
    )(*inputs)
    return idx2d[:, 0], scores


# ---------------------------------------------------------------------------
# Deterministic parameter construction (shapes follow nn.GRU / nn.Linear init)
# ---------------------------------------------------------------------------

def make_params(key, input_size, hidden_size, num_layers, vocab):
    """Returns (packed kernel params, raw PyTorch-layout params for the reference)."""
    H = hidden_size
    Hg = _round_up(H, _LANE)
    k = 1.0 / math.sqrt(H)
    u = partial(jax.random.uniform, minval=-k, maxval=k, dtype=jnp.float32)

    packed, raw = [], []
    for layer in range(num_layers):
        in_dim = input_size if layer == 0 else H
        key, *ks = jax.random.split(key, 13)
        # PyTorch stores weight_ih [3H, in] / weight_hh [3H, H]; we keep transposed
        # per-gate copies so the kernel does x @ W with fused gates.
        w_ir, w_iz, w_in = u(ks[0], (in_dim, H)), u(ks[1], (in_dim, H)), u(ks[2], (in_dim, H))
        w_hr, w_hz, w_hn = u(ks[3], (H, H)), u(ks[4], (H, H)), u(ks[5], (H, H))
        b_ir, b_iz, b_in = u(ks[6], (1, H)), u(ks[7], (1, H)), u(ks[8], (1, H))
        b_hr, b_hz, b_hn = u(ks[9], (1, H)), u(ks[10], (1, H)), u(ks[11], (1, H))
        raw.append(dict(w_ir=w_ir, w_iz=w_iz, w_in=w_in,
                        w_hr=w_hr, w_hz=w_hz, w_hn=w_hn,
                        b_ir=b_ir, b_iz=b_iz, b_in=b_in,
                        b_hr=b_hr, b_hz=b_hz, b_hn=b_hn))

        # Block-diagonal packed weight over [x | h]; gate blocks padded to Hg lanes.
        W = jnp.zeros((in_dim + H, 4 * Hg), jnp.float32)
        W = W.at[:in_dim, 0:H].set(w_ir).at[in_dim:, 0:H].set(w_hr)
        W = W.at[:in_dim, Hg:Hg + H].set(w_iz).at[in_dim:, Hg:Hg + H].set(w_hz)
        W = W.at[:in_dim, 2 * Hg:2 * Hg + H].set(w_in)
        W = W.at[in_dim:, 3 * Hg:3 * Hg + H].set(w_hn)

        bias = jnp.zeros((1, 4 * Hg), jnp.float32)
        bias = bias.at[:, 0:H].set(b_ir + b_hr)
        bias = bias.at[:, Hg:Hg + H].set(b_iz + b_hz)
        bias = bias.at[:, 2 * Hg:2 * Hg + H].set(b_in)
        bias = bias.at[:, 3 * Hg:3 * Hg + H].set(b_hn)

        packed.append((W.astype(jnp.bfloat16), bias))

    key, kw, kb = jax.random.split(key, 3)
    w = jax.random.uniform(kw, (H, vocab), minval=-k, maxval=k, dtype=jnp.float32)
    b = jax.random.uniform(kb, (1, vocab), minval=-k, maxval=k, dtype=jnp.float32)
    params = {"gru": packed,
              "w_h2o_t": w.astype(jnp.bfloat16),   # [H, V] bf16
              "b_h2o": b}                           # [1, V] f32
    return params, raw


# ---------------------------------------------------------------------------
# Pure-JAX reference: raw (un-packed) weights, standard PyTorch GRU equations,
# same bf16-matmul / f32-accumulate precision as the kernel. Also validates the
# block-diagonal weight packing.
# ---------------------------------------------------------------------------

def decoder_forward_ref(params, raw, inp, state):
    x = inp[0]
    dot = lambda a, w: jnp.dot(a.astype(jnp.bfloat16), w.astype(jnp.bfloat16),
                               preferred_element_type=jnp.float32)
    for layer in range(len(raw)):
        p = raw[layer]
        h = state[layer]
        r = jax.nn.sigmoid(dot(x, p["w_ir"]) + p["b_ir"] + dot(h, p["w_hr"]) + p["b_hr"])
        z = jax.nn.sigmoid(dot(x, p["w_iz"]) + p["b_iz"] + dot(h, p["w_hz"]) + p["b_hz"])
        n = jnp.tanh(dot(x, p["w_in"]) + p["b_in"] + r * (dot(h, p["w_hn"]) + p["b_hn"]))
        x = (1.0 - z) * n + z * h
    scores = jnp.dot(x.astype(jnp.bfloat16), params["w_h2o_t"],
                     preferred_element_type=jnp.float32) + params["b_h2o"]
    return jnp.argmax(scores, axis=1).astype(jnp.int32), scores


# ---------------------------------------------------------------------------

if __name__ == "__main__":
    B = 8              # multiple of 8 -> full f32 sublane tiles
    INPUT_SIZE = 32
    HIDDEN = 32
    NUM_LAYERS = 2
    VOCAB = 64         # len(dictionary)

    key = jax.random.PRNGKey(0)
    kp, kx, kh = jax.random.split(key, 3)
    params, raw = make_params(kp, INPUT_SIZE, HIDDEN, NUM_LAYERS, VOCAB)

    inp = jax.random.normal(kx, (1, B, INPUT_SIZE), dtype=jnp.float32)
    state = jax.random.normal(kh, (NUM_LAYERS, B, HIDDEN), dtype=jnp.float32)

    idx, scores = decoder_forward(params, inp, state)
    jax.block_until_ready((idx, scores))

    idx_ref, scores_ref = decoder_forward_ref(params, raw, inp, state)
    assert scores.shape == (B, VOCAB) and idx.shape == (B,)
    assert jnp.allclose(scores, scores_ref, atol=2e-3, rtol=2e-3), (
        float(jnp.max(jnp.abs(scores - scores_ref))))
    assert jnp.array_equal(idx, idx_ref)

    print("KERNEL_OK")
</pallas_src>

<mosaic_0001>
module attributes {stable_mosaic.version = 11 : i64} {
  func.func @kernel(%arg0: memref<8x32xf32, #tpu.memory_space<vmem>>, %arg1: memref<2x8x32xf32, #tpu.memory_space<vmem>>, %arg2: memref<64x512xbf16, #tpu.memory_space<vmem>>, %arg3: memref<1x512xf32, #tpu.memory_space<vmem>>, %arg4: memref<64x512xbf16, #tpu.memory_space<vmem>>, %arg5: memref<1x512xf32, #tpu.memory_space<vmem>>, %arg6: memref<32x64xbf16, #tpu.memory_space<vmem>>, %arg7: memref<1x64xf32, #tpu.memory_space<vmem>>, %arg8: memref<8x64xf32, #tpu.memory_space<vmem>>, %arg9: memref<8x1xi32, #tpu.memory_space<vmem>>) attributes {dimension_semantics = [], scalar_prefetch = 0 : i64, scratch_operands = 0 : i64, tpu.core_type = #tpu.core_type<tc>} {
    %c0 = arith.constant 0 : index
    %c0_0 = arith.constant 0 : index
    %0 = vector.load %arg0[%c0, %c0_0] : memref<8x32xf32, #tpu.memory_space<vmem>>, vector<8x32xf32>
    %c0_1 = arith.constant 0 : index
    %c0_2 = arith.constant 0 : index
    %c0_3 = arith.constant 0 : index
    %1 = vector.load %arg1[%c0_1, %c0_2, %c0_3] : memref<2x8x32xf32, #tpu.memory_space<vmem>>, vector<1x8x32xf32>
    %2 = vector.shape_cast %1 : vector<1x8x32xf32> to vector<8x32xf32>
    %3 = tpu.concatenate %0, %2 in 1 : vector<8x32xf32>, vector<8x32xf32> -> vector<8x64xf32>
    %4 = arith.truncf %3 : vector<8x64xf32> to vector<8x64xbf16>
    %c0_4 = arith.constant 0 : index
    %c0_5 = arith.constant 0 : index
    %5 = vector.load %arg2[%c0_4, %c0_5] : memref<64x512xbf16, #tpu.memory_space<vmem>>, vector<64x512xbf16>
    %cst = arith.constant dense<0.000000e+00> : vector<8x512xf32>
    %6 = tpu.matmul %4, %5, %cst {dimension_numbers = #tpu.dot_dimension_numbers<[1], [0], [0], [1], [0, 0, 1, 1], [], []>} : vector<8x64xbf16>, vector<64x512xbf16>, vector<8x512xf32> -> vector<8x512xf32>
    %c0_6 = arith.constant 0 : index
    %c0_7 = arith.constant 0 : index
    %7 = vector.load %arg3[%c0_6, %c0_7] : memref<1x512xf32, #tpu.memory_space<vmem>>, vector<1x512xf32>
    %8 = vector.broadcast %7 : vector<1x512xf32> to vector<8x512xf32>
    %9 = arith.addf %6, %8 : vector<8x512xf32>
    %10 = vector.extract_strided_slice %9 {offsets = [0, 0], sizes = [8, 32], strides = [1, 1]} : vector<8x512xf32> to vector<8x32xf32>
    %11 = arith.negf %10 : vector<8x32xf32>
    %12 = math.exp %11 : vector<8x32xf32>
    %cst_8 = arith.constant 1.000000e+00 : f32
    %13 = vector.broadcast %cst_8 : f32 to vector<8x32xf32>
    %14 = arith.addf %13, %12 : vector<8x32xf32>
    %15 = arith.divf %13, %14 : vector<8x32xf32>
    %16 = vector.extract_strided_slice %9 {offsets = [0, 128], sizes = [8, 32], strides = [1, 1]} : vector<8x512xf32> to vector<8x32xf32>
    %17 = arith.negf %16 : vector<8x32xf32>
    %18 = math.exp %17 : vector<8x32xf32>
    %cst_9 = arith.constant 1.000000e+00 : f32
    %19 = vector.broadcast %cst_9 : f32 to vector<8x32xf32>
    %20 = arith.addf %19, %18 : vector<8x32xf32>
    %21 = arith.divf %19, %20 : vector<8x32xf32>
    %22 = vector.extract_strided_slice %9 {offsets = [0, 256], sizes = [8, 32], strides = [1, 1]} : vector<8x512xf32> to vector<8x32xf32>
    %23 = vector.extract_strided_slice %9 {offsets = [0, 384], sizes = [8, 32], strides = [1, 1]} : vector<8x512xf32> to vector<8x32xf32>
    %24 = arith.mulf %15, %23 : vector<8x32xf32>
    %25 = arith.addf %22, %24 : vector<8x32xf32>
    %26 = math.tanh %25 : vector<8x32xf32>
    %cst_10 = arith.constant 1.000000e+00 : f32
    %27 = vector.broadcast %cst_10 : f32 to vector<8x32xf32>
    %28 = arith.subf %27, %21 : vector<8x32xf32>
    %29 = arith.mulf %28, %26 : vector<8x32xf32>
    %30 = arith.mulf %21, %2 : vector<8x32xf32>
    %31 = arith.addf %29, %30 : vector<8x32xf32>
    %c1 = arith.constant 1 : index
    %c0_11 = arith.constant 0 : index
    %c0_12 = arith.constant 0 : index
    %32 = vector.load %arg1[%c1, %c0_11, %c0_12] : memref<2x8x32xf32, #tpu.memory_space<vmem>>, vector<1x8x32xf32>
    %33 = vector.shape_cast %32 : vector<1x8x32xf32> to vector<8x32xf32>
    %34 = tpu.concatenate %31, %33 in 1 : vector<8x32xf32>, vector<8x32xf32> -> vector<8x64xf32>
    %35 = arith.truncf %34 : vector<8x64xf32> to vector<8x64xbf16>
    %c0_13 = arith.constant 0 : index
    %c0_14 = arith.constant 0 : index
    %36 = vector.load %arg4[%c0_13, %c0_14] : memref<64x512xbf16, #tpu.memory_space<vmem>>, vector<64x512xbf16>
    %cst_15 = arith.constant dense<0.000000e+00> : vector<8x512xf32>
    %37 = tpu.matmul %35, %36, %cst_15 {dimension_numbers = #tpu.dot_dimension_numbers<[1], [0], [0], [1], [0, 0, 1, 1], [], []>} : vector<8x64xbf16>, vector<64x512xbf16>, vector<8x512xf32> -> vector<8x512xf32>
    %c0_16 = arith.constant 0 : index
    %c0_17 = arith.constant 0 : index
    %38 = vector.load %arg5[%c0_16, %c0_17] : memref<1x512xf32, #tpu.memory_space<vmem>>, vector<1x512xf32>
    %39 = vector.broadcast %38 : vector<1x512xf32> to vector<8x512xf32>
    %40 = arith.addf %37, %39 : vector<8x512xf32>
    %41 = vector.extract_strided_slice %40 {offsets = [0, 0], sizes = [8, 32], strides = [1, 1]} : vector<8x512xf32> to vector<8x32xf32>
    %42 = arith.negf %41 : vector<8x32xf32>
    %43 = math.exp %42 : vector<8x32xf32>
    %cst_18 = arith.constant 1.000000e+00 : f32
    %44 = vector.broadcast %cst_18 : f32 to vector<8x32xf32>
    %45 = arith.addf %44, %43 : vector<8x32xf32>
    %46 = arith.divf %44, %45 : vector<8x32xf32>
    %47 = vector.extract_strided_slice %40 {offsets = [0, 128], sizes = [8, 32], strides = [1, 1]} : vector<8x512xf32> to vector<8x32xf32>
    %48 = arith.negf %47 : vector<8x32xf32>
    %49 = math.exp %48 : vector<8x32xf32>
    %cst_19 = arith.constant 1.000000e+00 : f32
    %50 = vector.broadcast %cst_19 : f32 to vector<8x32xf32>
    %51 = arith.addf %50, %49 : vector<8x32xf32>
    %52 = arith.divf %50, %51 : vector<8x32xf32>
    %53 = vector.extract_strided_slice %40 {offsets = [0, 256], sizes = [8, 32], strides = [1, 1]} : vector<8x512xf32> to vector<8x32xf32>
    %54 = vector.extract_strided_slice %40 {offsets = [0, 384], sizes = [8, 32], strides = [1, 1]} : vector<8x512xf32> to vector<8x32xf32>
    %55 = arith.mulf %46, %54 : vector<8x32xf32>
    %56 = arith.addf %53, %55 : vector<8x32xf32>
    %57 = math.tanh %56 : vector<8x32xf32>
    %cst_20 = arith.constant 1.000000e+00 : f32
    %58 = vector.broadcast %cst_20 : f32 to vector<8x32xf32>
    %59 = arith.subf %58, %52 : vector<8x32xf32>
    %60 = arith.mulf %59, %57 : vector<8x32xf32>
    %61 = arith.mulf %52, %33 : vector<8x32xf32>
    %62 = arith.addf %60, %61 : vector<8x32xf32>
    %63 = arith.truncf %62 : vector<8x32xf32> to vector<8x32xbf16>
    %c0_21 = arith.constant 0 : index
    %c0_22 = arith.constant 0 : index
    %64 = vector.load %arg6[%c0_21, %c0_22] : memref<32x64xbf16, #tpu.memory_space<vmem>>, vector<32x64xbf16>
    %cst_23 = arith.constant dense<0.000000e+00> : vector<8x64xf32>
    %65 = tpu.matmul %63, %64, %cst_23 {dimension_numbers = #tpu.dot_dimension_numbers<[1], [0], [0], [1], [0, 0, 1, 1], [], []>} : vector<8x32xbf16>, vector<32x64xbf16>, vector<8x64xf32> -> vector<8x64xf32>
    %c0_24 = arith.constant 0 : index
    %c0_25 = arith.constant 0 : index
    %66 = vector.load %arg7[%c0_24, %c0_25] : memref<1x64xf32, #tpu.memory_space<vmem>>, vector<1x64xf32>
    %67 = vector.broadcast %66 : vector<1x64xf32> to vector<8x64xf32>
    %68 = arith.addf %65, %67 : vector<8x64xf32>
    %c0_26 = arith.constant 0 : index
    %c0_27 = arith.constant 0 : index
    %69 = vector.load %arg8[%c0_26, %c0_27] : memref<8x64xf32, #tpu.memory_space<vmem>>, vector<8x64xf32>
    tpu.vector_store %arg8[%c0_26, %c0_27], %68 {strides = array<i32>} : memref<8x64xf32, #tpu.memory_space<vmem>>, vector<8x64xf32>,
    %cst_28 = arith.constant dense<0xFF800000> : vector<8xf32>
    %70 = vector.multi_reduction <maximumf>, %68, %cst_28 [1] : vector<8x64xf32> to vector<8xf32>
    %71 = vector.shape_cast %70 : vector<8xf32> to vector<8x1xf32>
    %72 = tpu.iota {dimensions = array<i32: 1>} : vector<8x64xi32>
    %73 = vector.broadcast %71 : vector<8x1xf32> to vector<8x64xf32>
    %74 = arith.cmpf oeq, %68, %73 : vector<8x64xf32>
    %75 = arith.sitofp %72 : vector<8x64xi32> to vector<8x64xf32>
    %cst_29 = arith.constant 6.400000e+01 : f32
    %76 = vector.broadcast %cst_29 : f32 to vector<8x64xf32>
    %77 = arith.select %74, %75, %76 : vector<8x64xi1>, vector<8x64xf32>
    %cst_30 = arith.constant dense<0x7F800000> : vector<8xf32>
    %78 = vector.multi_reduction <minimumf>, %77, %cst_30 [1] : vector<8x64xf32> to vector<8xf32>
    %79 = vector.shape_cast %78 : vector<8xf32> to vector<8x1xf32>
    %80 = arith.fptosi %79 : vector<8x1xf32> to vector<8x1xi32>
    %c0_31 = arith.constant 0 : index
    %c0_32 = arith.constant 0 : index
    %81 = vector.load %arg9[%c0_31, %c0_32] : memref<8x1xi32, #tpu.memory_space<vmem>>, vector<8x1xi32>
    tpu.vector_store %arg9[%c0_31, %c0_32], %80 {strides = array<i32>} : memref<8x1xi32, #tpu.memory_space<vmem>>, vector<8x1xi32>,
    return
  }
}

</mosaic_0001>

<llo_original>
// kernel: decoder_forward.1
$region0: #{decoder_forward.1}
  #allocation0 [shape = 'u32[]', space=smem, size = 0x4, offset = 0x4, fixed_abs, tag = 'smem constant byte address 0x4 - core index']
  #allocation1 [shape = 'u32[144,128]{1,0:T(1,128)}', space=vmem, size = 0x12000, scoped, tag = 'internal scratch']
  %s0 = inlined_call_operand.vmem [shape: f32[8,32], index: 0, kind: input, shape index: {}]
  %s1 = inlined_call_operand.hbm [shape: f32[2,8,32], index: 1, kind: input, shape index: {}]
  %s2 = inlined_call_operand.hbm [shape: bf16[64,512], index: 2, kind: input, shape index: {}]
  %s3 = inlined_call_operand.vmem [shape: f32[1,512], index: 3, kind: input, shape index: {}]
  %s4 = inlined_call_operand.hbm [shape: bf16[64,512], index: 4, kind: input, shape index: {}]
  %s5 = inlined_call_operand.hbm [shape: f32[1,512], index: 5, kind: input, shape index: {}]
  %s6 = inlined_call_operand.hbm [shape: bf16[32,64], index: 6, kind: input, shape index: {}]
  %s7 = inlined_call_operand.hbm [shape: f32[1,64], index: 7, kind: input, shape index: {}]
  %s8 = inlined_call_operand.hbm [shape: f32[8,64], index: 8, kind: output, shape index: {0}]
  %s9 = inlined_call_operand.vmem [shape: s32[8,1], index: 9, kind: output, shape index: {1}]
  %10 = xla_tuple %s8, %s9
  %s11 = sld [smem:[#allocation0]]
  $region74: #{decoder_forward.1} parent=0
    _
  %s13 = ssub.s32 1, %s11
  %s14 = scalar_select 0, %s13, %s11
  $region1: #{decoder_forward.1} parent=0
    #allocation2 [shape = 'u8[8192]{0}', space=vmem, size = 0x2000, scoped, tag = 'input window, operand 1, single buffered']
    #allocation3 [shape = 's32[1]{0}', space=sflag, size = 0x4, scoped, tag = 'scoped memory for decoder_forward.1']
    #allocation4 [shape = 's32[1]{0}', space=sflag, size = 0x4, scoped, tag = 'scoped memory for decoder_forward.1']
    #allocation5 [shape = 'u8[65536]{0}', space=vmem, size = 0x10000, scoped, tag = 'input window, operand 2, single buffered']
    #allocation6 [shape = 's32[1]{0}', space=sflag, size = 0x4, scoped, tag = 'scoped memory for decoder_forward.1']
    #allocation7 [shape = 'u8[65536]{0}', space=vmem, size = 0x10000, scoped, tag = 'input window, operand 4, single buffered']
    #allocation8 [shape = 'u8[2048]{0}', space=vmem, size = 0x800, scoped, tag = 'input window, operand 5, single buffered']
    #allocation9 [shape = 's32[1]{0}', space=sflag, size = 0x4, scoped, tag = 'scoped memory for decoder_forward.1']
    #allocation10 [shape = 'u8[8192]{0}', space=vmem, size = 0x2000, scoped, tag = 'input window, operand 6, single buffered']
    #allocation11 [shape = 'u8[512]{0}', space=vmem, size = 0x400, scoped, tag = 'input window, operand 7, single buffered']
    #allocation12 [shape = 's32[1]{0}', space=sflag, size = 0x4, scoped, tag = 'scoped memory for decoder_forward.1']
    #allocation13 [shape = 'u8[4096]{0}', space=vmem, size = 0x1000, scoped, tag = 'output window, operand 0, single buffered']
    %15 = vsyncpa [#allocation3], 0
    %16 = vsyncpa [#allocation6], 0
    %17 = vsyncpa [#allocation9], 0
    %18 = vsyncpa [#allocation12], 0
    %19 = vsyncpa [#allocation4], 0
    // Predicated region
    $region2: #{decoder_forward.1} parent=1 // pred_check
      _
    $region3: #{decoder_forward.1} parent=1 // pred_check_branch
      %21 = sbr.rel (0) target = $region5
    $region4: #{decoder_forward.1} parent=1 // pred_region
      _
    $region5: #{decoder_forward.1} parent=1 // pred_fallthru
      _
    // Predicated region
    $region6: #{decoder_forward.1} parent=1 // pred_check
      _
    $region7: #{decoder_forward.1} parent=1 // pred_check_branch
      %23 = sbr.rel (0) target = $region9
    $region8: #{decoder_forward.1} parent=1 // pred_region
      %s25 = ssub.s32 256, 256
      %26 = vsyncadd [#allocation3], %s25
      %s27 = sshll.u32 [#allocation2], 4
      %s28 = int_to_ptr.vmem [resolvable:$true] %s27
      %33 = dma.hbm_to_vmem [thread:$0]  %s1, 256, %s28, [#allocation3], 128, 128, 8
    $region9: #{decoder_forward.1} parent=1 // pred_fallthru
      _
    // Predicated region
    $region10: #{decoder_forward.1} parent=1 // pred_check
      _
    $region11: #{decoder_forward.1} parent=1 // pred_check_branch
      %35 = sbr.rel (0) target = $region13
    $region12: #{decoder_forward.1} parent=1 // pred_region
      %s37 = ssub.s32 2048, 2048
      %38 = vsyncadd [#allocation6], %s37
      %s39 = sshll.u32 [#allocation5], 4
      %s40 = int_to_ptr.vmem [resolvable:$true] %s39
      %45 = dma.hbm_to_vmem [thread:$0]  %s2, 2048, %s40, [#allocation6], 256, 256, 16
    $region13: #{decoder_forward.1} parent=1 // pred_fallthru
      _
    // Predicated region
    $region14: #{decoder_forward.1} parent=1 // pred_check
      _
    $region15: #{decoder_forward.1} parent=1 // pred_check_branch
      %47 = sbr.rel (0) target = $region17
    $region16: #{decoder_forward.1} parent=1 // pred_region
      _
    $region17: #{decoder_forward.1} parent=1 // pred_fallthru
      _
    // Predicated region
    $region18: #{decoder_forward.1} parent=1 // pred_check
      _
    $region19: #{decoder_forward.1} parent=1 // pred_check_branch
      %49 = sbr.rel (0) target = $region21
    $region20: #{decoder_forward.1} parent=1 // pred_region
      %s51 = ssub.s32 2048, 2048
      %52 = vsyncadd [#allocation6], %s51
      %s53 = sshll.u32 [#allocation7], 4
      %s54 = int_to_ptr.vmem [resolvable:$true] %s53
      %59 = dma.hbm_to_vmem [thread:$0]  %s4, 2048, %s54, [#allocation6], 256, 256, 16
    $region21: #{decoder_forward.1} parent=1 // pred_fallthru
      _
    // Predicated region
    $region22: #{decoder_forward.1} parent=1 // pred_check
      _
    $region23: #{decoder_forward.1} parent=1 // pred_check_branch
      %61 = sbr.rel (0) target = $region25
    $region24: #{decoder_forward.1} parent=1 // pred_region
      %s63 = ssub.s32 64, 64
      %64 = vsyncadd [#allocation9], %s63
      %s66 = sshll.u32 [#allocation8], 4
      %s67 = int_to_ptr.vmem [resolvable:$true] %s66
      %69 = dma.hbm_to_vmem [thread:$0]  %s5, 64, %s67, [#allocation9]
    $region25: #{decoder_forward.1} parent=1 // pred_fallthru
      _
    // Predicated region
    $region26: #{decoder_forward.1} parent=1 // pred_check
      _
    $region27: #{decoder_forward.1} parent=1 // pred_check_branch
      %71 = sbr.rel (0) target = $region29
    $region28: #{decoder_forward.1} parent=1 // pred_region
      %s73 = ssub.s32 256, 256
      %74 = vsyncadd [#allocation9], %s73
      %s75 = sshll.u32 [#allocation10], 4
      %s76 = int_to_ptr.vmem [resolvable:$true] %s75
      %81 = dma.hbm_to_vmem [thread:$0]  %s6, 256, %s76, [#allocation9], 64, 64, 4
    $region29: #{decoder_forward.1} parent=1 // pred_fallthru
      _
    // Predicated region
    $region30: #{decoder_forward.1} parent=1 // pred_check
      _
    $region31: #{decoder_forward.1} parent=1 // pred_check_branch
      %83 = sbr.rel (0) target = $region33
    $region32: #{decoder_forward.1} parent=1 // pred_region
      %s85 = ssub.s32 16, 16
      %86 = vsyncadd [#allocation12], %s85
      %s88 = sshll.u32 [#allocation11], 4
      %s89 = int_to_ptr.vmem [resolvable:$true] %s88
      %91 = dma.hbm_to_vmem [thread:$0]  %s7, 16, %s89, [#allocation12]
    $region33: #{decoder_forward.1} parent=1 // pred_fallthru
      _
    // Predicated region
    $region34: #{decoder_forward.1} parent=1 // pred_check
      _
    $region35: #{decoder_forward.1} parent=1 // pred_check_branch
      %93 = sbr.rel (0) target = $region37
    $region36: #{decoder_forward.1} parent=1 // pred_region
      %94 = dma.done [#allocation3], 256
    $region37: #{decoder_forward.1} parent=1 // pred_fallthru
      _
    // Predicated region
    $region38: #{decoder_forward.1} parent=1 // pred_check
      _
    $region39: #{decoder_forward.1} parent=1 // pred_check_branch
      %96 = sbr.rel (0) target = $region41
    $region40: #{decoder_forward.1} parent=1 // pred_region
      %97 = dma.done [#allocation6], 2048
    $region41: #{decoder_forward.1} parent=1 // pred_fallthru
      _
    // Predicated region
    $region42: #{decoder_forward.1} parent=1 // pred_check
      _
    $region43: #{decoder_forward.1} parent=1 // pred_check_branch
      %99 = sbr.rel (0) target = $region45
    $region44: #{decoder_forward.1} parent=1 // pred_region
      %100 = dma.done [#allocation6], 2048
    $region45: #{decoder_forward.1} parent=1 // pred_fallthru
      _
    // Predicated region
    $region46: #{decoder_forward.1} parent=1 // pred_check
      _
    $region47: #{decoder_forward.1} parent=1 // pred_check_branch
      %102 = sbr.rel (0) target = $region49
    $region48: #{decoder_forward.1} parent=1 // pred_region
      %103 = dma.done [#allocation9], 64
    $region49: #{decoder_forward.1} parent=1 // pred_fallthru
      _
    // Predicated region
    $region50: #{decoder_forward.1} parent=1 // pred_check
      _
    $region51: #{decoder_forward.1} parent=1 // pred_check_branch
      %105 = sbr.rel (0) target = $region53
    $region52: #{decoder_forward.1} parent=1 // pred_region
      %106 = dma.done [#allocation9], 256
    $region53: #{decoder_forward.1} parent=1 // pred_fallthru
      _
    // Predicated region
    $region54: #{decoder_forward.1} parent=1 // pred_check
      _
    $region55: #{decoder_forward.1} parent=1 // pred_check_branch
      %108 = sbr.rel (0) target = $region57
    $region56: #{decoder_forward.1} parent=1 // pred_region
      %109 = dma.done [#allocation12], 16
    $region57: #{decoder_forward.1} parent=1 // pred_fallthru
      _
    %v111 = vld [vmem:[%s0] sm:$0xff]
    %v112 = vld [vmem:[#allocation2] sm:$0xff]
    %114 = vrot.lane.b32.xlu0 %v112, 32
    %v115 = vpop.permute.xlu0 %114
    %vm117 = vcmask 261120
    %v118 = vsel %vm117, %v111, %v115
    %v119 = vpack.c.bf16 %v118, %v118
    %v120 = vld [vmem:[#allocation5] sm:$0xff]
    %v121 = vld [vmem:[#allocation5 + $0x8] sm:$0xff]
    %v122 = vld [vmem:[#allocation5 + $0x10] sm:$0xff]
    %v123 = vld [vmem:[#allocation5 + $0x18] sm:$0xff]
    %v124 = vld [vmem:[#allocation5 + $0x20] sm:$0xff]
    %v125 = vld [vmem:[#allocation5 + $0x28] sm:$0xff]
    %v126 = vld [vmem:[#allocation5 + $0x30] sm:$0xff]
    %v127 = vld [vmem:[#allocation5 + $0x38] sm:$0xff]
    %v128 = vld [vmem:[#allocation5 + $0x40] sm:$0xff]
    %v129 = vld [vmem:[#allocation5 + $0x48] sm:$0xff]
    %v130 = vld [vmem:[#allocation5 + $0x50] sm:$0xff]
    %v131 = vld [vmem:[#allocation5 + $0x58] sm:$0xff]
    %v132 = vld [vmem:[#allocation5 + $0x60] sm:$0xff]
    %v133 = vld [vmem:[#allocation5 + $0x68] sm:$0xff]
    %v134 = vld [vmem:[#allocation5 + $0x70] sm:$0xff]
    %v135 = vld [vmem:[#allocation5 + $0x78] sm:$0xff]
    %v136 = vld [vmem:[%s3] sm:$0xf]
    %v138 = vlaneseq
    %v139 = vshrl.u32 %v138, 7
    %v140 = vsub.s32 0, %v139
    %v141 = vrot.slane %v136, %v140
    %v142 = vlaneseq
    %v143 = vshrl.u32 %v142, 7
    %v144 = vsub.s32 1, %v143
    %v145 = vrot.slane %v136, %v144
    %v146 = vlaneseq
    %v147 = vshrl.u32 %v146, 7
    %v148 = vsub.s32 2, %v147
    %v149 = vrot.slane %v136, %v148
    %v150 = vlaneseq
    %v151 = vshrl.u32 %v150, 7
    %v152 = vsub.s32 3, %v151
    %v153 = vrot.slane %v136, %v152
    %v174 = vunpack.c.l.b16 %v120
    %v175 = vunpack.c.h.b16 %v120
    %v176 = vunpack.c.l.b16 %v121
    %v177 = vunpack.c.h.b16 %v121
    %v178 = vunpack.c.l.b16 %v122
    %v179 = vunpack.c.h.b16 %v122
    %v180 = vunpack.c.l.b16 %v123
    %v181 = vunpack.c.h.b16 %v123
    %v182 = vunpack.c.l.b16 %v124
    %v183 = vunpack.c.h.b16 %v124
    %v184 = vunpack.c.l.b16 %v125
    %v185 = vunpack.c.h.b16 %v125
    %v186 = vunpack.c.l.b16 %v126
    %v187 = vunpack.c.h.b16 %v126
    %v188 = vunpack.c.l.b16 %v127
    %v189 = vunpack.c.h.b16 %v127
    %v190 = vunpack.c.l.b16 %v128
    %v191 = vunpack.c.h.b16 %v128
    %v192 = vunpack.c.l.b16 %v129
    %v193 = vunpack.c.h.b16 %v129
    %v194 = vunpack.c.l.b16 %v130
    %v195 = vunpack.c.h.b16 %v130
    %v196 = vunpack.c.l.b16 %v131
    %v197 = vunpack.c.h.b16 %v131
    %v198 = vunpack.c.l.b16 %v132
    %v199 = vunpack.c.h.b16 %v132
    %v200 = vunpack.c.l.b16 %v133
    %v201 = vunpack.c.h.b16 %v133
    %v202 = vunpack.c.l.b16 %v134
    %v203 = vunpack.c.h.b16 %v134
    %v204 = vunpack.c.l.b16 %v135
    %v205 = vunpack.c.h.b16 %v135
    %v206 = vpack.c.b16 %v178, %v174
    %v207 = vpack.c.b16 %v179, %v175
    %v208 = vpack.c.b16 %v180, %v176
    %v209 = vpack.c.b16 %v181, %v177
    %v210 = vpack.c.b16 %v186, %v182
    %v211 = vpack.c.b16 %v187, %v183
    %v212 = vpack.c.b16 %v188, %v184
    %v213 = vpack.c.b16 %v189, %v185
    %v214 = vpack.c.b16 %v194, %v190
    %v215 = vpack.c.b16 %v195, %v191
    %v216 = vpack.c.b16 %v196, %v192
    %v217 = vpack.c.b16 %v197, %v193
    %v218 = vpack.c.b16 %v202, %v198
    %v219 = vpack.c.b16 %v203, %v199
    %v220 = vpack.c.b16 %v204, %v200
    %v221 = vpack.c.b16 %v205, %v201
    %vm238 = vcmask 523264
    %v240 = vsel %vm238, %v119, 0
    %242 = vmatprep.subr.bf16.mxu0 0
    %243 = vmatpush1.bf16.msra.mxu0 0
    %244 = vmatprep.subr.bf16.mxu0 0
    %245 = vmatpush1.bf16.msra.mxu0 0
    %246 = vmatprep.subr.bf16.mxu0 0
    %247 = vmatpush1.bf16.msra.mxu0 0
    %248 = vmatprep.subr.bf16.mxu0 0
    %249 = vmatpush1.bf16.msra.mxu0 0
    %250 = vmatprep.subr.bf16.mxu0 %v219
    %251 = vmatpush1.bf16.msra.mxu0 %v218
    %252 = vmatprep.subr.bf16.mxu0 %v215
    %253 = vmatpush1.bf16.msra.mxu0 %v214
    %254 = vmatprep.subr.bf16.mxu0 %v211
    %255 = vmatpush1.bf16.msra.mxu0 %v210
    %256 = vmatprep.subr.bf16.mxu0 %v207
    %257 = vmatpush1.bf16.msra.mxu0 %v206
    %258 = vmatprep.subr.bf16.mxu0 0
    %259 = vmatpush2.bf16.msra.mxu0 0
    %260 = vmatprep.subr.bf16.mxu0 0
    %261 = vmatpush2.bf16.msra.mxu0 0
    %262 = vmatprep.subr.bf16.mxu0 0
    %263 = vmatpush2.bf16.msra.mxu0 0
    %264 = vmatprep.subr.bf16.mxu0 0
    %265 = vmatpush2.bf16.msra.mxu0 0
    %266 = vmatprep.subr.bf16.mxu0 0
    %267 = vmatpush2.bf16.msra.mxu0 0
    %268 = vmatprep.subr.bf16.mxu0 0
    %269 = vmatpush2.bf16.msra.mxu0 0
    %270 = vmatprep.subr.bf16.mxu0 0
    %271 = vmatpush2.bf16.msra.mxu0 0
    %272 = vmatprep.subr.bf16.mxu0 0
    %273 = vmatpush2.bf16.msra.mxu0 0
    %274 = vmatprep.mubr.bf16.mxu0 0
    %275 = vmatmul.mubr.bf16.gmra.mxu0 %v240
    %v276 = vpop.f32.mrf.mxu0
    %v277 = vadd.f32 %v141, %v276
    %v278 = vpop.f32.mrf.mxu0
    %v279 = vadd.f32 %v145, %v278
    %v280 = vpop.f32.mrf.mxu0
    %v281 = vpop.f32.mrf.mxu0
    %282 = vdwg.mxu0
    %283 = vmatprep.subr.bf16.mxu0 0
    %284 = vmatpush1.bf16.msra.mxu0 0
    %285 = vmatprep.subr.bf16.mxu0 0
    %286 = vmatpush1.bf16.msra.mxu0 0
    %287 = vmatprep.subr.bf16.mxu0 0
    %288 = vmatpush1.bf16.msra.mxu0 0
    %289 = vmatprep.subr.bf16.mxu0 0
    %290 = vmatpush1.bf16.msra.mxu0 0
    %291 = vmatprep.subr.bf16.mxu0 %v221
    %292 = vmatpush1.bf16.msra.mxu0 %v220
    %293 = vmatprep.subr.bf16.mxu0 %v217
    %294 = vmatpush1.bf16.msra.mxu0 %v216
    %295 = vmatprep.subr.bf16.mxu0 %v213
    %296 = vmatpush1.bf16.msra.mxu0 %v212
    %297 = vmatprep.subr.bf16.mxu0 %v209
    %298 = vmatpush1.bf16.msra.mxu0 %v208
    %299 = vmatprep.subr.bf16.mxu0 0
    %300 = vmatpush2.bf16.msra.mxu0 0
    %301 = vmatprep.subr.bf16.mxu0 0
    %302 = vmatpush2.bf16.msra.mxu0 0
    %303 = vmatprep.subr.bf16.mxu0 0
    %304 = vmatpush2.bf16.msra.mxu0 0
    %305 = vmatprep.subr.bf16.mxu0 0
    %306 = vmatpush2.bf16.msra.mxu0 0
    %307 = vmatprep.subr.bf16.mxu0 0
    %308 = vmatpush2.bf16.msra.mxu0 0
    %309 = vmatprep.subr.bf16.mxu0 0
    %310 = vmatpush2.bf16.msra.mxu0 0
    %311 = vmatprep.subr.bf16.mxu0 0
    %312 = vmatpush2.bf16.msra.mxu0 0
    %313 = vmatprep.subr.bf16.mxu0 0
    %314 = vmatpush2.bf16.msra.mxu0 0
    %315 = vmatprep.mubr.bf16.mxu0 0
    %316 = vmatmul.mubr.bf16.gmra.mxu0 %v240
    %v317 = vpop.f32.mrf.mxu0
    %v318 = vadd.f32 %v149, %v317
    %v319 = vpop.f32.mrf.mxu0
    %v320 = vadd.f32 %v153, %v319
    %v321 = vpop.f32.mrf.mxu0
    %v322 = vpop.f32.mrf.mxu0
    %323 = vdwg.mxu0
    %v324 = vxor.u32 %v277, 2147483648
    %v325 = vmul.f32 %v324, 1.442695
    %v326 = vpow.pop %v325
    %v327 = vadd.f32 %v326, 1.0
    %v328 = vrcp.pop %v327
    %v329 = vmul.f32 1.0, %v328
    %v330 = vxor.u32 %v279, 2147483648
    %v331 = vmul.f32 %v330, 1.442695
    %v332 = vpow.pop %v331
    %v333 = vadd.f32 %v332, 1.0
    %v334 = vrcp.pop %v333
    %v335 = vmul.f32 1.0, %v334
    %v336 = vmul.f32 %v329, %v320
    %v337 = vadd.f32 %v318, %v336
    %v338 = vtanh.pop %v337
    %v339 = vsub.f32 1.0, %v335
    %v340 = vmul.f32 %v339, %v338
    %v341 = vmul.f32 %v335, %v112
    %v342 = vadd.f32 %v340, %v341
    %s343 = scalar_lea.vmem [#allocation2], 8
    %v344 = vld [vmem:[%s343] sm:$0xff]
    %346 = vrot.lane.b32.xlu0 %v344, 32
    %v347 = vpop.permute.xlu0 %346
    %v349 = vsel %vm117, %v342, %v347
    %v350 = vpack.c.bf16 %v349, %v349
    %v351 = vld [vmem:[#allocation7] sm:$0xff]
    %v352 = vld [vmem:[#allocation7 + $0x8] sm:$0xff]
    %v353 = vld [vmem:[#allocation7 + $0x10] sm:$0xff]
    %v354 = vld [vmem:[#allocation7 + $0x18] sm:$0xff]
    %v355 = vld [vmem:[#allocation7 + $0x20] sm:$0xff]
    %v356 = vld [vmem:[#allocation7 + $0x28] sm:$0xff]
    %v357 = vld [vmem:[#allocation7 + $0x30] sm:$0xff]
    %v358 = vld [vmem:[#allocation7 + $0x38] sm:$0xff]
    %v359 = vld [vmem:[#allocation7 + $0x40] sm:$0xff]
    %v360 = vld [vmem:[#allocation7 + $0x48] sm:$0xff]
    %v361 = vld [vmem:[#allocation7 + $0x50] sm:$0xff]
    %v362 = vld [vmem:[#allocation7 + $0x58] sm:$0xff]
    %v363 = vld [vmem:[#allocation7 + $0x60] sm:$0xff]
    %v364 = vld [vmem:[#allocation7 + $0x68] sm:$0xff]
    %v365 = vld [vmem:[#allocation7 + $0x70] sm:$0xff]
    %v366 = vld [vmem:[#allocation7 + $0x78] sm:$0xff]
    %v367 = vld [vmem:[#allocation8] sm:$0xf]
    %v369 = vlaneseq
    %v370 = vshrl.u32 %v369, 7
    %v371 = vsub.s32 0, %v370
    %v372 = vrot.slane %v367, %v371
    %v373 = vlaneseq
    %v374 = vshrl.u32 %v373, 7
    %v375 = vsub.s32 1, %v374
    %v376 = vrot.slane %v367, %v375
    %v377 = vlaneseq
    %v378 = vshrl.u32 %v377, 7
    %v379 = vsub.s32 2, %v378
    %v380 = vrot.slane %v367, %v379
    %v381 = vlaneseq
    %v382 = vshrl.u32 %v381, 7
    %v383 = vsub.s32 3, %v382
    %v384 = vrot.slane %v367, %v383
    %v405 = vunpack.c.l.b16 %v351
    %v406 = vunpack.c.h.b16 %v351
    %v407 = vunpack.c.l.b16 %v352
    %v408 = vunpack.c.h.b16 %v352
    %v409 = vunpack.c.l.b16 %v353
    %v410 = vunpack.c.h.b16 %v353
    %v411 = vunpack.c.l.b16 %v354
    %v412 = vunpack.c.h.b16 %v354
    %v413 = vunpack.c.l.b16 %v355
    %v414 = vunpack.c.h.b16 %v355
    %v415 = vunpack.c.l.b16 %v356
    %v416 = vunpack.c.h.b16 %v356
    %v417 = vunpack.c.l.b16 %v357
    %v418 = vunpack.c.h.b16 %v357
    %v419 = vunpack.c.l.b16 %v358
    %v420 = vunpack.c.h.b16 %v358
    %v421 = vunpack.c.l.b16 %v359
    %v422 = vunpack.c.h.b16 %v359
    %v423 = vunpack.c.l.b16 %v360
    %v424 = vunpack.c.h.b16 %v360
    %v425 = vunpack.c.l.b16 %v361
    %v426 = vunpack.c.h.b16 %v361
    %v427 = vunpack.c.l.b16 %v362
    %v428 = vunpack.c.h.b16 %v362
    %v429 = vunpack.c.l.b16 %v363
    %v430 = vunpack.c.h.b16 %v363
    %v431 = vunpack.c.l.b16 %v364
    %v432 = vunpack.c.h.b16 %v364
    %v433 = vunpack.c.l.b16 %v365
    %v434 = vunpack.c.h.b16 %v365
    %v435 = vunpack.c.l.b16 %v366
    %v436 = vunpack.c.h.b16 %v366
    %v437 = vpack.c.b16 %v409, %v405
    %v438 = vpack.c.b16 %v410, %v406
    %v439 = vpack.c.b16 %v411, %v407
    %v440 = vpack.c.b16 %v412, %v408
    %v441 = vpack.c.b16 %v417, %v413
    %v442 = vpack.c.b16 %v418, %v414
    %v443 = vpack.c.b16 %v419, %v415
    %v444 = vpack.c.b16 %v420, %v416
    %v445 = vpack.c.b16 %v425, %v421
    %v446 = vpack.c.b16 %v426, %v422
    %v447 = vpack.c.b16 %v427, %v423
    %v448 = vpack.c.b16 %v428, %v424
    %v449 = vpack.c.b16 %v433, %v429
    %v450 = vpack.c.b16 %v434, %v430
    %v451 = vpack.c.b16 %v435, %v431
    %v452 = vpack.c.b16 %v436, %v432
    %v470 = vsel %vm238, %v350, 0
    %472 = vmatprep.subr.bf16.mxu0 0
    %473 = vmatpush1.bf16.msra.mxu0 0
    %474 = vmatprep.subr.bf16.mxu0 0
    %475 = vmatpush1.bf16.msra.mxu0 0
    %476 = vmatprep.subr.bf16.mxu0 0
    %477 = vmatpush1.bf16.msra.mxu0 0
    %478 = vmatprep.subr.bf16.mxu0 0
    %479 = vmatpush1.bf16.msra.mxu0 0
    %480 = vmatprep.subr.bf16.mxu0 %v450
    %481 = vmatpush1.bf16.msra.mxu0 %v449
    %482 = vmatprep.subr.bf16.mxu0 %v446
    %483 = vmatpush1.bf16.msra.mxu0 %v445
    %484 = vmatprep.subr.bf16.mxu0 %v442
    %485 = vmatpush1.bf16.msra.mxu0 %v441
    %486 = vmatprep.subr.bf16.mxu0 %v438
    %487 = vmatpush1.bf16.msra.mxu0 %v437
    %488 = vmatprep.subr.bf16.mxu0 0
    %489 = vmatpush2.bf16.msra.mxu0 0
    %490 = vmatprep.subr.bf16.mxu0 0
    %491 = vmatpush2.bf16.msra.mxu0 0
    %492 = vmatprep.subr.bf16.mxu0 0
    %493 = vmatpush2.bf16.msra.mxu0 0
    %494 = vmatprep.subr.bf16.mxu0 0
    %495 = vmatpush2.bf16.msra.mxu0 0
    %496 = vmatprep.subr.bf16.mxu0 0
    %497 = vmatpush2.bf16.msra.mxu0 0
    %498 = vmatprep.subr.bf16.mxu0 0
    %499 = vmatpush2.bf16.msra.mxu0 0
    %500 = vmatprep.subr.bf16.mxu0 0
    %501 = vmatpush2.bf16.msra.mxu0 0
    %502 = vmatprep.subr.bf16.mxu0 0
    %503 = vmatpush2.bf16.msra.mxu0 0
    %504 = vmatprep.mubr.bf16.mxu0 0
    %505 = vmatmul.mubr.bf16.gmra.mxu0 %v470
    %v506 = vpop.f32.mrf.mxu0
    %v507 = vadd.f32 %v372, %v506
    %v508 = vpop.f32.mrf.mxu0
    %v509 = vadd.f32 %v376, %v508
    %v510 = vpop.f32.mrf.mxu0
    %v511 = vpop.f32.mrf.mxu0
    %512 = vdwg.mxu0
    %513 = vmatprep.subr.bf16.mxu0 0
    %514 = vmatpush1.bf16.msra.mxu0 0
    %515 = vmatprep.subr.bf16.mxu0 0
    %516 = vmatpush1.bf16.msra.mxu0 0
    %517 = vmatprep.subr.bf16.mxu0 0
    %518 = vmatpush1.bf16.msra.mxu0 0
    %519 = vmatprep.subr.bf16.mxu0 0
    %520 = vmatpush1.bf16.msra.mxu0 0
    %521 = vmatprep.subr.bf16.mxu0 %v452
    %522 = vmatpush1.bf16.msra.mxu0 %v451
    %523 = vmatprep.subr.bf16.mxu0 %v448
    %524 = vmatpush1.bf16.msra.mxu0 %v447
    %525 = vmatprep.subr.bf16.mxu0 %v444
    %526 = vmatpush1.bf16.msra.mxu0 %v443
    %527 = vmatprep.subr.bf16.mxu0 %v440
    %528 = vmatpush1.bf16.msra.mxu0 %v439
    %529 = vmatprep.subr.bf16.mxu0 0
    %530 = vmatpush2.bf16.msra.mxu0 0
    %531 = vmatprep.subr.bf16.mxu0 0
    %532 = vmatpush2.bf16.msra.mxu0 0
    %533 = vmatprep.subr.bf16.mxu0 0
    %534 = vmatpush2.bf16.msra.mxu0 0
    %535 = vmatprep.subr.bf16.mxu0 0
    %536 = vmatpush2.bf16.msra.mxu0 0
    %537 = vmatprep.subr.bf16.mxu0 0
    %538 = vmatpush2.bf16.msra.mxu0 0
    %539 = vmatprep.subr.bf16.mxu0 0
    %540 = vmatpush2.bf16.msra.mxu0 0
    %541 = vmatprep.subr.bf16.mxu0 0
    %542 = vmatpush2.bf16.msra.mxu0 0
    %543 = vmatprep.subr.bf16.mxu0 0
    %544 = vmatpush2.bf16.msra.mxu0 0
    %545 = vmatprep.mubr.bf16.mxu0 0
    %546 = vmatmul.mubr.bf16.gmra.mxu0 %v470
    %v547 = vpop.f32.mrf.mxu0
    %v548 = vadd.f32 %v380, %v547
    %v549 = vpop.f32.mrf.mxu0
    %v550 = vadd.f32 %v384, %v549
    %v551 = vpop.f32.mrf.mxu0
    %v552 = vpop.f32.mrf.mxu0
    %553 = vdwg.mxu0
    %v554 = vxor.u32 %v507, 2147483648
    %v555 = vmul.f32 %v554, 1.442695
    %v556 = vpow.pop %v555
    %v557 = vadd.f32 %v556, 1.0
    %v558 = vrcp.pop %v557
    %v559 = vmul.f32 1.0, %v558
    %v560 = vxor.u32 %v509, 2147483648
    %v561 = vmul.f32 %v560, 1.442695
    %v562 = vpow.pop %v561
    %v563 = vadd.f32 %v562, 1.0
    %v564 = vrcp.pop %v563
    %v565 = vmul.f32 1.0, %v564
    %v566 = vmul.f32 %v559, %v550
    %v567 = vadd.f32 %v548, %v566
    %v568 = vtanh.pop %v567
    %v569 = vsub.f32 1.0, %v565
    %v570 = vmul.f32 %v569, %v568
    %v571 = vmul.f32 %v565, %v344
    %v572 = vadd.f32 %v570, %v571
    %v573 = vpack.c.bf16 %v572, %v572
    %v574 = vld [vmem:[#allocation10] sm:$0xf]
    %v575 = vld [vmem:[#allocation10 + $0x4] sm:$0xf]
    %v576 = vld [vmem:[#allocation10 + $0x8] sm:$0xf]
    %v577 = vld [vmem:[#allocation10 + $0xc] sm:$0xf]
    %v578 = vld [vmem:[#allocation11] sm:$0x1]
    %v580 = vlaneseq
    %v581 = vshrl.u32 %v580, 7
    %v582 = vsub.s32 0, %v581
    %v583 = vrot.slane %v578, %v582
    %v589 = vunpack.c.l.b16 %v574
    %v590 = vunpack.c.l.b16 %v575
    %v591 = vunpack.c.l.b16 %v576
    %v592 = vunpack.c.l.b16 %v577
    %v593 = vpack.c.b16 %v590, %v589
    %v594 = vpack.c.b16 %v592, %v591
    %v598 = vsel %vm117, %v573, 0
    %600 = vmatprep.subr.bf16.mxu0 0
    %601 = vmatpush1.bf16.msra.mxu0 0
    %602 = vmatprep.subr.bf16.mxu0 0
    %603 = vmatpush1.bf16.msra.mxu0 0
    %604 = vmatprep.subr.bf16.mxu0 0
    %605 = vmatpush1.bf16.msra.mxu0 0
    %606 = vmatprep.subr.bf16.mxu0 0
    %607 = vmatpush1.bf16.msra.mxu0 0
    %608 = vmatprep.subr.bf16.mxu0 0
    %609 = vmatpush1.bf16.msra.mxu0 0
    %610 = vmatprep.subr.bf16.mxu0 0
    %611 = vmatpush1.bf16.msra.mxu0 0
    %612 = vmatprep.subr.bf16.mxu0 0
    %613 = vmatpush1.bf16.msra.mxu0 %v594
    %614 = vmatprep.subr.bf16.mxu0 0
    %615 = vmatpush1.bf16.msra.mxu0 %v593
    %616 = vmatprep.subr.bf16.mxu0 0
    %617 = vmatpush2.bf16.msra.mxu0 0
    %618 = vmatprep.subr.bf16.mxu0 0
    %619 = vmatpush2.bf16.msra.mxu0 0
    %620 = vmatprep.subr.bf16.mxu0 0
    %621 = vmatpush2.bf16.msra.mxu0 0
    %622 = vmatprep.subr.bf16.mxu0 0
    %623 = vmatpush2.bf16.msra.mxu0 0
    %624 = vmatprep.subr.bf16.mxu0 0
    %625 = vmatpush2.bf16.msra.mxu0 0
    %626 = vmatprep.subr.bf16.mxu0 0
    %627 = vmatpush2.bf16.msra.mxu0 0
    %628 = vmatprep.subr.bf16.mxu0 0
    %629 = vmatpush2.bf16.msra.mxu0 0
    %630 = vmatprep.subr.bf16.mxu0 0
    %631 = vmatpush2.bf16.msra.mxu0 0
    %632 = vmatprep.mubr.bf16.mxu0 0
    %633 = vmatmul.mubr.bf16.gmra.mxu0 %v598
    %v634 = vpop.f32.mrf.mxu0
    %v635 = vadd.f32 %v583, %v634
    %v636 = vpop.f32.mrf.mxu0
    %v637 = vpop.f32.mrf.mxu0
    %v638 = vpop.f32.mrf.mxu0
    %639 = vdwg.mxu0
    %640 = vst.msk [vmem:[#allocation13] sm:$0xff] %vm238, %v635
    %v641 = vsel %vm238, %v635, -inf
    %642 = vmax.xlane.f32.xlu0 %v641
    %v643 = vpop.xlane.xlu0 %642
    %v644 = vlaneseq
    %v645 = vand.u32 %v644, 127
    %vm646 = vcmp.eq.f32.partialorder %v635, %v643
    %v647 = vcvt.s32.f32 %v645
    %v648 = vsel %vm646, %v647, 64.0
    %v649 = vsel %vm238, %v648, inf
    %650 = vmin.xlane.f32.xlu0 %v649
    %v651 = vpop.xlane.xlu0 %650
    %v652 = vcvt.f32.s32.to.zero.pseudo %v651
    %vm653 = vcmask 7168
    %654 = vst.msk [vmem:[%s9] sm:$0xff] %vm653, %v652
    // Predicated region
    $region58: #{decoder_forward.1} parent=1 // pred_check
      _
    $region59: #{decoder_forward.1} parent=1 // pred_check_branch
      %656 = sbr.rel (0) target = $region61
    $region60: #{decoder_forward.1} parent=1 // pred_region
      %s658 = ssub.s32 128, 128
      %659 = vsyncadd [#allocation4], %s658
      %s661 = sshll.u32 [#allocation13], 4
      %s662 = int_to_ptr.vmem [resolvable:$true] %s661
      %664 = dma.vmem_to_hbm [thread:$0]  %s662, 128, %s8, [#allocation4]
    $region61: #{decoder_forward.1} parent=1 // pred_fallthru
      _
    // Predicated region
    $region62: #{decoder_forward.1} parent=1 // pred_check
      _
    $region63: #{decoder_forward.1} parent=1 // pred_check_branch
      %666 = sbr.rel (0) target = $region65
    $region64: #{decoder_forward.1} parent=1 // pred_region
      _
    $region65: #{decoder_forward.1} parent=1 // pred_fallthru
      _
    // Predicated region
    $region66: #{decoder_forward.1} parent=1 // pred_check
      _
    $region67: #{decoder_forward.1} parent=1 // pred_check_branch
      %668 = sbr.rel (0) target = $region69
    $region68: #{decoder_forward.1} parent=1 // pred_region
      %669 = dma.done [#allocation4], 128
    $region69: #{decoder_forward.1} parent=1 // pred_fallthru
      _
    // Predicated region
    $region70: #{decoder_forward.1} parent=1 // pred_check
      _
    $region71: #{decoder_forward.1} parent=1 // pred_check_branch
      %671 = sbr.rel (0) target = $region73
    $region72: #{decoder_forward.1} parent=1 // pred_region
      _
    $region73: #{decoder_forward.1} parent=1 // pred_fallthru
      _
    %672 = vsyncpa [#allocation3], 1
    %673 = vsyncpa [#allocation6], 1
    %674 = vsyncpa [#allocation9], 1
    %675 = vsyncpa [#allocation12], 1
    %676 = vsyncpa [#allocation4], 1

</llo_original>
